<compile_context>
chip_gen: v7x
topology: tpu7x:2x2x1
jax: 0.10.0
libtpu: 0.0.40
codegen_flags: <defaults>
</compile_context>

<pallas_src>
import math
from functools import partial

import jax
import jax.numpy as jnp
from jax.experimental import pallas as pl
from jax.experimental.pallas import tpu as pltpu


def _round_up(n, m):
    return ((n + m - 1) // m) * m


def _make_kernel(t_real):
    """Build the per-batch-tile kernel; t_real = un-padded number of time steps."""

    def kernel(x_ref, xlast_ref, wq_ref, bq_ref, wkv_ref, bkv_ref, wout_ref,
               v_ref, a_ref):
        TB, Tp, Dp = x_ref.shape
        Hp = wq_ref.shape[1]

        # ---- fused K/V projection: one wide MXU matmul over all time steps ----
        # (TB, Tp, Dp) -> (TB*Tp, Dp): leading-dim merge; Tp % 8 == 0 and
        # Dp % 128 == 0 so this does not cross (8,128) tiles (no relayout).
        x2d = x_ref[...].reshape(TB * Tp, Dp)
        kv = jnp.dot(x2d, wkv_ref[...], preferred_element_type=jnp.float32)
        kv = kv + bkv_ref[...]                               # (TB*Tp, 2*Hp) f32
        kv3 = kv.reshape(TB, Tp, 2 * Hp)
        k = kv3[:, :, 0:Hp]                                  # (TB, Tp, Hp)
        vv = kv3[:, :, Hp:2 * Hp]                            # (TB, Tp, Hp)

        # ---- Q projection on the final real time step only (tiny matmul) ----
        # b_in is folded into bq in the wrapper (exact: it only appears as q+k+b_in).
        q = jnp.dot(xlast_ref[...], wq_ref[...], preferred_element_type=jnp.float32)
        q = q + bq_ref[...]                                  # (TB, Hp)

        # ---- additive attention scores: e = W_out(tanh(q + k + b_in)) ----
        # NOTE: tanh over TB*Tp*Hp elements runs on the single EUP slot; for
        # small Dp it can become the binding unit.  If profiling shows EUP
        # saturation, mask to the un-padded H lanes before the tanh.
        h = jnp.tanh(q[:, None, :] + k)                      # (TB, Tp, Hp) f32
        # W_out contraction kept as VPU multiply + lane reduce: it is O(T*H) vs
        # the O(T*D*2H) projection above and yields e directly in (TB, Tp).
        e = jnp.sum(h * wout_ref[...].reshape(1, 1, Hp), axis=-1)   # (TB, Tp)

        # mask padded time steps, then softmax over time (exact normalization:
        # `a` is a returned output, so rows must sum to 1 in f32 precision).
        t_idx = jax.lax.broadcasted_iota(jnp.int32, (TB, Tp), 1)
        e = jnp.where(t_idx < t_real, e, -1e30)
        m = jnp.max(e, axis=-1, keepdims=True)
        ex = jnp.exp(e - m)
        denom = jnp.sum(ex, axis=-1, keepdims=True)
        a = ex / denom                                       # (TB, Tp)

        # TODO(synk): nn.Dropout(p=dropout) with dropout=None is ill-defined in
        # the reference module; treated as identity (inference behaviour).
        # TODO(synk): for very large T, stream K/V over T-chunks with an online
        # softmax so VMEM does not scale with T (keeps the working set under
        # v7x's 64 MiB budget).

        # weighted sum of values: VPU multiply + sublane reduce (no M=1 matmuls)
        v = jnp.sum(a[:, :, None] * vv, axis=1)              # (TB, Hp) f32

        v_ref[...] = v.astype(v_ref.dtype)                   # lane-dense (Hp % 128 == 0)
        a_ref[...] = a.astype(a_ref.dtype)                   # single store of the full block

    return kernel


@partial(jax.jit, static_argnames=("batch_tile", "matmul_dtype", "vmem_limit_bytes"))
def final_attention_qkv_add(x, params, *, batch_tile=8, matmul_dtype=jnp.bfloat16,
                            vmem_limit_bytes=32 * 1024 * 1024):
    """x: (B, T, D) float. params: dict (see init_params). Returns (v: (B,H), a: (B,T)).

    matmul_dtype=jnp.bfloat16 (default) halves HBM/VMEM traffic for x and the
    resident weights and uses the bf16-native MXU on v5e; accumulation and all
    elementwise math stay f32.  Pass jnp.float32 for strict f32 parity.

    Generation-aware sizing: raise batch_tile / vmem_limit_bytes on v5e/v6e
    (128 MiB VMEM) so TB*Tp fills the MXU M dim and amortizes per-grid-step
    overhead; on v7x (64 MiB VMEM) keep the per-tile working set under ~48 MiB
    and keep Bp/TB >= 8 so both TensorCores get several grid steps.
    """
    B, T, D = x.shape
    H = params["w_q"].shape[1]
    f32 = jnp.float32

    LANE, SUB = 128, 8
    Dp = _round_up(D, LANE)                      # lane-pad input dim
    Hp = _round_up(H, LANE)                      # lane-pad hidden dim
    Tp = _round_up(T, SUB)                       # sublane-pad time
    TB = _round_up(max(batch_tile, SUB), SUB)    # batch tile (multiple of 8)
    Bp = _round_up(B, TB)

    # ---- wrapper-side packing / padding (cheap XLA ops in HBM) ----
    # Cast once in the source-sized array, then pad (no extra f32 materialization).
    x_p = jnp.pad(x.astype(matmul_dtype), ((0, Bp - B), (0, Tp - T), (0, Dp - D)))
    x_last = x_p[:, T - 1, :]                    # (Bp, Dp): last *real* time step

    # TODO(synk): for small H, pack the fused K/V width as round_up(2*H, 128)
    # and realign K/V with pltpu.roll instead of padding each projection to a
    # full 128 lanes (cuts matmul N and the kv intermediate ~2-3x when H << 128).
    w_kv = jnp.zeros((Dp, 2 * Hp), f32)
    w_kv = w_kv.at[:D, 0 * Hp:0 * Hp + H].set(params["w_k"].astype(f32))
    w_kv = w_kv.at[:D, 1 * Hp:1 * Hp + H].set(params["w_v"].astype(f32))
    w_kv = w_kv.astype(matmul_dtype)

    b_kv = jnp.zeros((1, 2 * Hp), f32)
    b_kv = b_kv.at[:, 0 * Hp:0 * Hp + H].set(params["b_k"].astype(f32))
    b_kv = b_kv.at[:, 1 * Hp:1 * Hp + H].set(params["b_v"].astype(f32))

    w_q = jnp.zeros((Dp, Hp), f32).at[:D, :H].set(params["w_q"].astype(f32)).astype(matmul_dtype)
    # b_in only ever appears as (q + k + b_in): fold it into the Q bias (exact).
    b_q = jnp.zeros((1, Hp), f32).at[:, :H].set(params["b_q"].astype(f32) + params["b_in"][0])
    w_out_p = jnp.zeros((1, Hp), f32).at[:, :H].set(params["w_out"].astype(f32))
    # b_out is dropped: softmax(e + b_out) == softmax(e) (shift invariance), so it
    # has no effect on the module's returned (v, a).

    grid = (Bp // TB,)

    itemsize = jnp.dtype(matmul_dtype).itemsize
    cost = pl.CostEstimate(
        flops=2 * Bp * Tp * Dp * 2 * Hp            # fused K/V projection
              + 2 * Bp * Dp * Hp                   # Q projection (last step only)
              + 6 * Bp * Tp * Hp,                  # add/mul/reduce epilogue
        transcendentals=Bp * Tp * (Hp + 1),        # tanh + exp
        bytes_accessed=(Bp * Tp * Dp + Bp * Dp + Dp * 2 * Hp + Dp * Hp) * itemsize
                       + (2 * Hp + Hp + Hp) * 4
                       + (Bp * Hp + Bp * Tp) * 4,
    )

    # TODO(synk): pin the resident weight operands to a single VMEM buffer
    # (pipeline_mode=pl.Buffered(1)) for large D/H on v7x's 64 MiB VMEM; their
    # index_map is constant so double-buffering them only wastes VMEM.
    call = pl.pallas_call(
        _make_kernel(T),
        grid=grid,
        in_specs=[
            pl.BlockSpec((TB, Tp, Dp), lambda i: (i, 0, 0)),   # x: batch-tiled, auto double-buffered
            pl.BlockSpec((TB, Dp), lambda i: (i, 0)),          # x[:, T-1, :]: Q input
            pl.BlockSpec((Dp, Hp), lambda i: (0, 0)),          # W_q (resident)
            pl.BlockSpec((1, Hp), lambda i: (0, 0)),           # b_q (+ b_in folded in)
            pl.BlockSpec((Dp, 2 * Hp), lambda i: (0, 0)),      # fused W_k|W_v (resident)
            pl.BlockSpec((1, 2 * Hp), lambda i: (0, 0)),       # fused b_k|b_v
            pl.BlockSpec((1, Hp), lambda i: (0, 0)),           # W_out row
        ],
        out_specs=(
            pl.BlockSpec((TB, Hp), lambda i: (i, 0)),          # v: lane-dense (Hp % 128 == 0)
            pl.BlockSpec((TB, Tp), lambda i: (i, 0)),          # a: single store, full-width block
        ),
        out_shape=(
            jax.ShapeDtypeStruct((Bp, Hp), jnp.float32),
            jax.ShapeDtypeStruct((Bp, Tp), jnp.float32),
        ),
        compiler_params=pltpu.CompilerParams(
            dimension_semantics=("parallel",),   # shard batch tiles across TensorCores (v7x)
            vmem_limit_bytes=vmem_limit_bytes,   # raise on v5e/v6e (128 MiB) for larger tiles
        ),
        cost_estimate=cost,
    )

    v_full, a_full = call(x_p, x_last, w_q, b_q, w_kv, b_kv, w_out_p)
    return v_full[:B, :H], a_full[:B, :T]


def init_params(key, input_dim, hidden_dim):
    """Deterministic init mirroring the PyTorch module's shapes/bounds
    (kaiming_uniform_ with a=sqrt(5) => uniform(+-1/sqrt(fan_in)))."""
    ks = jax.random.split(key, 8)
    bd = 1.0 / math.sqrt(input_dim)   # fan_in = input_dim for W_q/W_k/W_v
    bh = 1.0 / math.sqrt(hidden_dim)  # fan_in = hidden_dim for W_out

    def u(k, shape, bound):
        return jax.random.uniform(k, shape, jnp.float32, -bound, bound)

    return {
        # stored as (in_dim, out_dim) == PyTorch weight.T
        "w_q": u(ks[0], (input_dim, hidden_dim), bd),
        "b_q": u(ks[1], (1, hidden_dim), bd),
        "w_k": u(ks[2], (input_dim, hidden_dim), bd),
        "b_k": u(ks[3], (1, hidden_dim), bd),
        "w_v": u(ks[4], (input_dim, hidden_dim), bd),
        "b_v": u(ks[5], (1, hidden_dim), bd),
        # W_out: PyTorch weight shape (1, hidden_dim) — kept as a row vector
        "w_out": u(ks[6], (1, hidden_dim), bh),
        "b_out": u(ks[7], (1,), bh),
        "b_in": jnp.zeros((1,), jnp.float32),
    }


def reference_forward(x, p):
    """Pure-JAX reference of the PyTorch forward (attention_type='add')."""
    hi = jax.lax.Precision.HIGHEST
    q = jnp.dot(x[:, -1, :], p["w_q"], precision=hi) + p["b_q"]            # (B, H)
    k = jnp.einsum("btd,dh->bth", x, p["w_k"], precision=hi) + p["b_k"][None]
    v = jnp.einsum("btd,dh->bth", x, p["w_v"], precision=hi) + p["b_v"][None]
    h = jnp.tanh(q[:, None, :] + k + p["b_in"][0])
    e = jnp.einsum("bth,h->bt", h, p["w_out"][0], precision=hi) + p["b_out"][0]
    a = jax.nn.softmax(e, axis=1)
    out_v = jnp.einsum("bt,bth->bh", a, v, precision=hi)
    return out_v, a


if __name__ == "__main__":
    # batch, time_step, attention_input_dim, attention_hidden_dim
    # (B=12 / T=10 exercise batch padding, time padding + softmax masking,
    #  lane padding D,H -> 128, and a multi-step "parallel" batch grid.)
    B, T, D, H = 12, 10, 32, 32

    key = jax.random.PRNGKey(0)
    k_x, k_p = jax.random.split(key)
    x = jax.random.normal(k_x, (B, T, D), jnp.float32)
    params = init_params(k_p, D, H)

    v_ref, a_ref = reference_forward(x, params)

    # ---- f32 matmul-operand path: tight parity with the reference ----
    v32, a32 = final_attention_qkv_add(x, params, batch_tile=8, matmul_dtype=jnp.float32)
    v32, a32 = jax.block_until_ready((v32, a32))
    assert v32.shape == (B, H) and a32.shape == (B, T)
    assert jnp.allclose(v32, v_ref, atol=1e-3, rtol=1e-3), float(jnp.max(jnp.abs(v32 - v_ref)))
    assert jnp.allclose(a32, a_ref, atol=1e-3, rtol=1e-3), float(jnp.max(jnp.abs(a32 - a_ref)))
    # exact softmax normalization: attention rows sum to 1
    assert jnp.allclose(jnp.sum(a32, axis=1), 1.0, atol=1e-5), float(jnp.max(jnp.abs(jnp.sum(a32, axis=1) - 1.0)))

    # ---- bf16 matmul-operand path (default): looser tolerance from input rounding ----
    vbf, abf = final_attention_qkv_add(x, params, batch_tile=8)
    vbf, abf = jax.block_until_ready((vbf, abf))
    assert vbf.shape == (B, H) and abf.shape == (B, T)
    assert jnp.allclose(vbf, v_ref, atol=3e-2, rtol=3e-2), float(jnp.max(jnp.abs(vbf - v_ref)))
    assert jnp.allclose(abf, a_ref, atol=3e-2, rtol=3e-2), float(jnp.max(jnp.abs(abf - a_ref)))

    print("KERNEL_OK")
</pallas_src>

<mosaic_0001>
module attributes {stable_mosaic.version = 11 : i64} {
  func.func @kernel(%arg0: i32, %arg1: memref<8x16x128xf32, #tpu.memory_space<vmem>>, %arg2: memref<8x128xf32, #tpu.memory_space<vmem>>, %arg3: memref<128x128xf32, #tpu.memory_space<vmem>>, %arg4: memref<1x128xf32, #tpu.memory_space<vmem>>, %arg5: memref<128x256xf32, #tpu.memory_space<vmem>>, %arg6: memref<1x256xf32, #tpu.memory_space<vmem>>, %arg7: memref<1x128xf32, #tpu.memory_space<vmem>>, %arg8: memref<8x128xf32, #tpu.memory_space<vmem>>, %arg9: memref<8x16xf32, #tpu.memory_space<vmem>>) attributes {dimension_semantics = [#tpu.dimension_semantics<parallel>], iteration_bounds = array<i64: 2>, scalar_prefetch = 0 : i64, scratch_operands = 0 : i64, tpu.core_type = #tpu.core_type<tc>, window_params = [{transform_indices = @transform_0, window_bounds = array<i64: 8, 16, 128>}, {transform_indices = @transform_1, window_bounds = array<i64: 8, 128>}, {pipeline_mode = #tpu.pipeline_mode<synchronous>, transform_indices = @transform_2, window_bounds = array<i64: 128, 128>}, {pipeline_mode = #tpu.pipeline_mode<synchronous>, transform_indices = @transform_3, window_bounds = array<i64: 1, 128>}, {pipeline_mode = #tpu.pipeline_mode<synchronous>, transform_indices = @transform_4, window_bounds = array<i64: 128, 256>}, {pipeline_mode = #tpu.pipeline_mode<synchronous>, transform_indices = @transform_5, window_bounds = array<i64: 1, 256>}, {pipeline_mode = #tpu.pipeline_mode<synchronous>, transform_indices = @transform_6, window_bounds = array<i64: 1, 128>}, {transform_indices = @transform_7, window_bounds = array<i64: 8, 128>}, {transform_indices = @transform_8, window_bounds = array<i64: 8, 16>}]} {
    %c0 = arith.constant 0 : index
    %c0_0 = arith.constant 0 : index
    %c0_1 = arith.constant 0 : index
    %0 = vector.load %arg1[%c0, %c0_0, %c0_1] : memref<8x16x128xf32, #tpu.memory_space<vmem>>, vector<8x16x128xf32>
    %1 = vector.shape_cast %0 : vector<8x16x128xf32> to vector<128x128xf32>
    %c0_2 = arith.constant 0 : index
    %c0_3 = arith.constant 0 : index
    %2 = vector.load %arg5[%c0_2, %c0_3] : memref<128x256xf32, #tpu.memory_space<vmem>>, vector<128x256xf32>
    %cst = arith.constant dense<0.000000e+00> : vector<128x256xf32>
    %3 = tpu.matmul %1, %2, %cst {dimension_numbers = #tpu.dot_dimension_numbers<[1], [0], [0], [1], [0, 0, 1, 1], [], []>} : vector<128x128xf32>, vector<128x256xf32>, vector<128x256xf32> -> vector<128x256xf32>
    %c0_4 = arith.constant 0 : index
    %c0_5 = arith.constant 0 : index
    %4 = vector.load %arg6[%c0_4, %c0_5] : memref<1x256xf32, #tpu.memory_space<vmem>>, vector<1x256xf32>
    %5 = vector.broadcast %4 : vector<1x256xf32> to vector<128x256xf32>
    %6 = arith.addf %3, %5 : vector<128x256xf32>
    %7 = vector.shape_cast %6 : vector<128x256xf32> to vector<8x16x256xf32>
    %8 = vector.extract_strided_slice %7 {offsets = [0, 0, 0], sizes = [8, 16, 128], strides = [1, 1, 1]} : vector<8x16x256xf32> to vector<8x16x128xf32>
    %9 = vector.extract_strided_slice %7 {offsets = [0, 0, 128], sizes = [8, 16, 128], strides = [1, 1, 1]} : vector<8x16x256xf32> to vector<8x16x128xf32>
    %c0_6 = arith.constant 0 : index
    %c0_7 = arith.constant 0 : index
    %10 = vector.load %arg2[%c0_6, %c0_7] : memref<8x128xf32, #tpu.memory_space<vmem>>, vector<8x128xf32>
    %c0_8 = arith.constant 0 : index
    %c0_9 = arith.constant 0 : index
    %11 = vector.load %arg3[%c0_8, %c0_9] : memref<128x128xf32, #tpu.memory_space<vmem>>, vector<128x128xf32>
    %cst_10 = arith.constant dense<0.000000e+00> : vector<8x128xf32>
    %12 = tpu.matmul %10, %11, %cst_10 {dimension_numbers = #tpu.dot_dimension_numbers<[1], [0], [0], [1], [0, 0, 1, 1], [], []>} : vector<8x128xf32>, vector<128x128xf32>, vector<8x128xf32> -> vector<8x128xf32>
    %c0_11 = arith.constant 0 : index
    %c0_12 = arith.constant 0 : index
    %13 = vector.load %arg4[%c0_11, %c0_12] : memref<1x128xf32, #tpu.memory_space<vmem>>, vector<1x128xf32>
    %14 = vector.broadcast %13 : vector<1x128xf32> to vector<8x128xf32>
    %15 = arith.addf %12, %14 : vector<8x128xf32>
    %16 = vector.shape_cast %15 : vector<8x128xf32> to vector<8x1x128xf32>
    %17 = vector.broadcast %16 : vector<8x1x128xf32> to vector<8x16x128xf32>
    %18 = arith.addf %17, %8 : vector<8x16x128xf32>
    %19 = math.tanh %18 : vector<8x16x128xf32>
    %c0_13 = arith.constant 0 : index
    %c0_14 = arith.constant 0 : index
    %20 = vector.load %arg7[%c0_13, %c0_14] : memref<1x128xf32, #tpu.memory_space<vmem>>, vector<1x128xf32>
    %21 = vector.shape_cast %20 : vector<1x128xf32> to vector<1x1x128xf32>
    %22 = vector.broadcast %21 : vector<1x1x128xf32> to vector<8x16x128xf32>
    %23 = arith.mulf %19, %22 : vector<8x16x128xf32>
    %cst_15 = arith.constant dense<0.000000e+00> : vector<8x16xf32>
    %24 = vector.multi_reduction <add>, %23, %cst_15 [2] : vector<8x16x128xf32> to vector<8x16xf32>
    %25 = tpu.iota {dimensions = array<i32: 1>} : vector<8x16xi32>
    %c10_i32 = arith.constant 10 : i32
    %26 = vector.broadcast %c10_i32 : i32 to vector<8x16xi32>
    %27 = arith.cmpi slt, %25, %26 : vector<8x16xi32>
    %cst_16 = arith.constant -1.000000e+30 : f32
    %28 = vector.broadcast %cst_16 : f32 to vector<8x16xf32>
    %29 = arith.select %27, %24, %28 : vector<8x16xi1>, vector<8x16xf32>
    %cst_17 = arith.constant dense<0xFF800000> : vector<8xf32>
    %30 = vector.multi_reduction <maximumf>, %29, %cst_17 [1] : vector<8x16xf32> to vector<8xf32>
    %31 = vector.shape_cast %30 : vector<8xf32> to vector<8x1xf32>
    %32 = vector.broadcast %31 : vector<8x1xf32> to vector<8x16xf32>
    %33 = arith.subf %29, %32 : vector<8x16xf32>
    %34 = math.exp %33 : vector<8x16xf32>
    %cst_18 = arith.constant dense<0.000000e+00> : vector<8xf32>
    %35 = vector.multi_reduction <add>, %34, %cst_18 [1] : vector<8x16xf32> to vector<8xf32>
    %36 = vector.shape_cast %35 : vector<8xf32> to vector<8x1xf32>
    %37 = vector.broadcast %36 : vector<8x1xf32> to vector<8x16xf32>
    %38 = arith.divf %34, %37 : vector<8x16xf32>
    %39 = vector.shape_cast %38 : vector<8x16xf32> to vector<8x16x1xf32>
    %40 = vector.broadcast %39 : vector<8x16x1xf32> to vector<8x16x128xf32>
    %41 = arith.mulf %40, %9 : vector<8x16x128xf32>
    %cst_19 = arith.constant dense<0.000000e+00> : vector<8x128xf32>
    %42 = vector.multi_reduction <add>, %41, %cst_19 [1] : vector<8x16x128xf32> to vector<8x128xf32>
    %c0_20 = arith.constant 0 : index
    %c0_21 = arith.constant 0 : index
    %43 = vector.load %arg8[%c0_20, %c0_21] : memref<8x128xf32, #tpu.memory_space<vmem>>, vector<8x128xf32>
    tpu.vector_store %arg8[%c0_20, %c0_21], %42 {strides = array<i32>} : memref<8x128xf32, #tpu.memory_space<vmem>>, vector<8x128xf32>,
    %c0_22 = arith.constant 0 : index
    %c0_23 = arith.constant 0 : index
    %44 = vector.load %arg9[%c0_22, %c0_23] : memref<8x16xf32, #tpu.memory_space<vmem>>, vector<8x16xf32>
    tpu.vector_store %arg9[%c0_22, %c0_23], %38 {strides = array<i32>} : memref<8x16xf32, #tpu.memory_space<vmem>>, vector<8x16xf32>,
    return
  }
  func.func @transform_0(%arg0: i32) -> (i32, i32, i32) {
    %c0_i32 = arith.constant 0 : i32
    %c0_i32_0 = arith.constant 0 : i32
    %c0_i32_1 = arith.constant 0 : i32
    return %arg0, %c0_i32, %c0_i32_0 : i32, i32, i32
  }
  func.func @transform_1(%arg0: i32) -> (i32, i32) {
    %c0_i32 = arith.constant 0 : i32
    %c0_i32_0 = arith.constant 0 : i32
    return %arg0, %c0_i32 : i32, i32
  }
  func.func @transform_2(%arg0: i32) -> (i32, i32) {
    %c0_i32 = arith.constant 0 : i32
    %c0_i32_0 = arith.constant 0 : i32
    %c0_i32_1 = arith.constant 0 : i32
    return %c0_i32, %c0_i32_0 : i32, i32
  }
  func.func @transform_3(%arg0: i32) -> (i32, i32) {
    %c0_i32 = arith.constant 0 : i32
    %c0_i32_0 = arith.constant 0 : i32
    %c0_i32_1 = arith.constant 0 : i32
    return %c0_i32, %c0_i32_0 : i32, i32
  }
  func.func @transform_4(%arg0: i32) -> (i32, i32) {
    %c0_i32 = arith.constant 0 : i32
    %c0_i32_0 = arith.constant 0 : i32
    %c0_i32_1 = arith.constant 0 : i32
    return %c0_i32, %c0_i32_0 : i32, i32
  }
  func.func @transform_5(%arg0: i32) -> (i32, i32) {
    %c0_i32 = arith.constant 0 : i32
    %c0_i32_0 = arith.constant 0 : i32
    %c0_i32_1 = arith.constant 0 : i32
    return %c0_i32, %c0_i32_0 : i32, i32
  }
  func.func @transform_6(%arg0: i32) -> (i32, i32) {
    %c0_i32 = arith.constant 0 : i32
    %c0_i32_0 = arith.constant 0 : i32
    %c0_i32_1 = arith.constant 0 : i32
    return %c0_i32, %c0_i32_0 : i32, i32
  }
  func.func @transform_7(%arg0: i32) -> (i32, i32) {
    %c0_i32 = arith.constant 0 : i32
    %c0_i32_0 = arith.constant 0 : i32
    return %arg0, %c0_i32 : i32, i32
  }
  func.func @transform_8(%arg0: i32) -> (i32, i32) {
    %c0_i32 = arith.constant 0 : i32
    %c0_i32_0 = arith.constant 0 : i32
    return %arg0, %c0_i32 : i32, i32
  }
}

</mosaic_0001>

<llo_original>
// kernel: final_attention_qkv_add.1
$region0: #{final_attention_qkv_add.1}
  #allocation0 [shape = 'u32[]', space=smem, size = 0x4, offset = 0x4, fixed_abs, tag = 'smem constant byte address 0x4 - core index']
  #allocation1 [shape = 'u32[144,128]{1,0:T(1,128)}', space=vmem, size = 0x12000, scoped, tag = 'internal scratch']
  %s0 = inlined_call_operand.vmem [shape: f32[16,16,128], index: 0, kind: input, shape index: {}]
  %s1 = inlined_call_operand.vmem [shape: f32[16,128], index: 1, kind: input, shape index: {}]
  %s2 = inlined_call_operand.vmem [shape: f32[128,128], index: 2, kind: input, shape index: {}]
  %s3 = inlined_call_operand.vmem [shape: f32[1,128], index: 3, kind: input, shape index: {}]
  %s4 = inlined_call_operand.vmem [shape: f32[128,256], index: 4, kind: input, shape index: {}]
  %s5 = inlined_call_operand.vmem [shape: f32[1,256], index: 5, kind: input, shape index: {}]
  %s6 = inlined_call_operand.vmem [shape: f32[1,128], index: 6, kind: input, shape index: {}]
  %s7 = inlined_call_operand.hbm [shape: f32[16,128], index: 7, kind: output, shape index: {0}]
  %s8 = inlined_call_operand.hbm [shape: f32[16,16], index: 8, kind: output, shape index: {1}]
  %9 = xla_tuple %s7, %s8
  %s10 = sld [smem:[#allocation0]]
  $region69: #{final_attention_qkv_add.1} parent=0
    _
  %s12 = ssub.s32 1, %s10
  %s13 = scalar_select 0, %s12, %s10
  $region1: #{final_attention_qkv_add.1} parent=0
    #allocation2 [shape = 'u8[8192]{0}', space=vmem, size = 0x2000, scoped, tag = 'output window, operand 0']
    #allocation3 [shape = 's32[2]{0}', space=sflag, size = 0x8, scoped, tag = 'scoped memory for final_attention_qkv_add.1']
    #allocation4 [shape = 'u8[8192]{0}', space=vmem, size = 0x2000, scoped, tag = 'output window, operand 1']
    #allocation5 [shape = 's32[2]{0}', space=sflag, size = 0x8, scoped, tag = 'scoped memory for final_attention_qkv_add.1']
    %14 = vsyncpa [#allocation3], 0
    %s15 = scalar_lea.sflag [#allocation3], 1
    %16 = vsyncpa %s15, 0
    %17 = vsyncpa [#allocation5], 0
    %s18 = scalar_lea.sflag [#allocation5], 1
    %19 = vsyncpa %s18, 0
    loop: start=0, step=1, limit=4
    $region2: #{final_attention_qkv_add.1} parent=1 // loop_pre_header
      _
    $region3: #{final_attention_qkv_add.1} parent=1 // loop_header
      %s21 = sphi 0, %s25
      %p22 = scmp.ge.s32.totalorder %s21, 4
      %s31 = sphi 0, %s33
      %s34 = sphi 0, %s31
      %s35 = sphi 0, %s34
      %s51 = sphi 0, %s35
      %s57 = sphi 0, %s59
      %s60 = sphi 0, %s57
      %s61 = sphi 0, %s60
      %s77 = sphi 0, %s61
      %s81 = sphi 0, %s81
      %s83 = sphi 0, %s81
      %s84 = sphi 0, %s83
      %s98 = sphi 0, %s84
      %s102 = sphi 0, %s102
      %s104 = sphi 0, %s102
      %s105 = sphi 0, %s104
      %s119 = sphi 0, %s105
      %s123 = sphi 0, %s123
      %s125 = sphi 0, %s123
      %s126 = sphi 0, %s125
      %s140 = sphi 0, %s126
      %s144 = sphi 0, %s144
      %s146 = sphi 0, %s144
      %s147 = sphi 0, %s146
      %s161 = sphi 0, %s147
      %s165 = sphi 0, %s165
      %s167 = sphi 0, %s165
      %s168 = sphi 0, %s167
      %s182 = sphi 0, %s168
      %s188 = sphi 0, %s190
      %s191 = sphi 0, %s188
      %s192 = sphi 0, %s191
      %s208 = sphi 0, %s192
      %s214 = sphi 0, %s216
      %s217 = sphi 0, %s214
      %s218 = sphi 0, %s217
      %s234 = sphi 0, %s218
    $region4: #{final_attention_qkv_add.1} parent=1 // loop_header_branch
      %24 = sbr.rel (%p22) target = $region8
    $region5: #{final_attention_qkv_add.1} parent=1 // loop_body
      %s26 = ssub.s32 %s21, 1
      %s27 = ssub.s32 %s21, 2
      %s28 = sadd.s32 %s21, 1
      %s29 = ssub.s32 %s21, %s28
      %p30 = scmp.eq.s32.totalorder %s29, 0
      %s32 = sadd.s32 %s31, 1
      %s33 = scalar_select %p30, %s31, %s32
      %p36 = pneg %p30
      %p37 = scmp.eq.s32.totalorder %s21, 1
      %p38 = por %p36, %p37
      %p39 = scmp.ne.s32.totalorder %s31, %s34
      %p40 = scmp.eq.s32.totalorder %s21, 0
      %p41 = por %p39, %p40
      %p42 = scmp.ne.s32.totalorder %s31, %s34
      %p43 = scmp.eq.s32.totalorder %s26, 1
      %p44 = por %p42, %p43
      %p45 = scmp.ne.s32.totalorder %s34, %s35
      %p46 = scmp.eq.s32.totalorder %s26, 0
      %p47 = por %p45, %p46
      %p48 = scmp.ne.s32.totalorder %s34, %s35
      %p49 = scmp.eq.s32.totalorder %s27, 1
      %p50 = por %p48, %p49
      %p52 = scmp.ne.s32.totalorder %s35, %s51
      %p53 = scmp.eq.s32.totalorder %s27, 0
      %p54 = por %p52, %p53
      %s55 = ssub.s32 %s21, %s28
      %p56 = scmp.eq.s32.totalorder %s55, 0
      %s58 = sadd.s32 %s57, 1
      %s59 = scalar_select %p56, %s57, %s58
      %p62 = pneg %p56
      %p63 = scmp.eq.s32.totalorder %s21, 1
      %p64 = por %p62, %p63
      %p65 = scmp.ne.s32.totalorder %s57, %s60
      %p66 = scmp.eq.s32.totalorder %s21, 0
      %p67 = por %p65, %p66
      %p68 = scmp.ne.s32.totalorder %s57, %s60
      %p69 = scmp.eq.s32.totalorder %s26, 1
      %p70 = por %p68, %p69
      %p71 = scmp.ne.s32.totalorder %s60, %s61
      %p72 = scmp.eq.s32.totalorder %s26, 0
      %p73 = por %p71, %p72
      %p74 = scmp.ne.s32.totalorder %s60, %s61
      %p75 = scmp.eq.s32.totalorder %s27, 1
      %p76 = por %p74, %p75
      %p78 = scmp.ne.s32.totalorder %s61, %s77
      %p79 = scmp.eq.s32.totalorder %s27, 0
      %p80 = por %p78, %p79
      %s82 = sadd.s32 %s81, 1
      %p85 = scmp.eq.s32.totalorder %s21, 1
      %p86 = scmp.ne.s32.totalorder %s81, %s83
      %p87 = scmp.eq.s32.totalorder %s21, 0
      %p88 = por %p86, %p87
      %p89 = scmp.ne.s32.totalorder %s81, %s83
      %p90 = scmp.eq.s32.totalorder %s26, 1
      %p91 = por %p89, %p90
      %p92 = scmp.ne.s32.totalorder %s83, %s84
      %p93 = scmp.eq.s32.totalorder %s26, 0
      %p94 = por %p92, %p93
      %p95 = scmp.ne.s32.totalorder %s83, %s84
      %p96 = scmp.eq.s32.totalorder %s27, 1
      %p97 = por %p95, %p96
      %p99 = scmp.ne.s32.totalorder %s84, %s98
      %p100 = scmp.eq.s32.totalorder %s27, 0
      %p101 = por %p99, %p100
      %s103 = sadd.s32 %s102, 1
      %p106 = scmp.eq.s32.totalorder %s21, 1
      %p107 = scmp.ne.s32.totalorder %s102, %s104
      %p108 = scmp.eq.s32.totalorder %s21, 0
      %p109 = por %p107, %p108
      %p110 = scmp.ne.s32.totalorder %s102, %s104
      %p111 = scmp.eq.s32.totalorder %s26, 1
      %p112 = por %p110, %p111
      %p113 = scmp.ne.s32.totalorder %s104, %s105
      %p114 = scmp.eq.s32.totalorder %s26, 0
      %p115 = por %p113, %p114
      %p116 = scmp.ne.s32.totalorder %s104, %s105
      %p117 = scmp.eq.s32.totalorder %s27, 1
      %p118 = por %p116, %p117
      %p120 = scmp.ne.s32.totalorder %s105, %s119
      %p121 = scmp.eq.s32.totalorder %s27, 0
      %p122 = por %p120, %p121
      %s124 = sadd.s32 %s123, 1
      %p127 = scmp.eq.s32.totalorder %s21, 1
      %p128 = scmp.ne.s32.totalorder %s123, %s125
      %p129 = scmp.eq.s32.totalorder %s21, 0
      %p130 = por %p128, %p129
      %p131 = scmp.ne.s32.totalorder %s123, %s125
      %p132 = scmp.eq.s32.totalorder %s26, 1
      %p133 = por %p131, %p132
      %p134 = scmp.ne.s32.totalorder %s125, %s126
      %p135 = scmp.eq.s32.totalorder %s26, 0
      %p136 = por %p134, %p135
      %p137 = scmp.ne.s32.totalorder %s125, %s126
      %p138 = scmp.eq.s32.totalorder %s27, 1
      %p139 = por %p137, %p138
      %p141 = scmp.ne.s32.totalorder %s126, %s140
      %p142 = scmp.eq.s32.totalorder %s27, 0
      %p143 = por %p141, %p142
      %s145 = sadd.s32 %s144, 1
      %p148 = scmp.eq.s32.totalorder %s21, 1
      %p149 = scmp.ne.s32.totalorder %s144, %s146
      %p150 = scmp.eq.s32.totalorder %s21, 0
      %p151 = por %p149, %p150
      %p152 = scmp.ne.s32.totalorder %s144, %s146
      %p153 = scmp.eq.s32.totalorder %s26, 1
      %p154 = por %p152, %p153
      %p155 = scmp.ne.s32.totalorder %s146, %s147
      %p156 = scmp.eq.s32.totalorder %s26, 0
      %p157 = por %p155, %p156
      %p158 = scmp.ne.s32.totalorder %s146, %s147
      %p159 = scmp.eq.s32.totalorder %s27, 1
      %p160 = por %p158, %p159
      %p162 = scmp.ne.s32.totalorder %s147, %s161
      %p163 = scmp.eq.s32.totalorder %s27, 0
      %p164 = por %p162, %p163
      %s166 = sadd.s32 %s165, 1
      %p169 = scmp.eq.s32.totalorder %s21, 1
      %p170 = scmp.ne.s32.totalorder %s165, %s167
      %p171 = scmp.eq.s32.totalorder %s21, 0
      %p172 = por %p170, %p171
      %p173 = scmp.ne.s32.totalorder %s165, %s167
      %p174 = scmp.eq.s32.totalorder %s26, 1
      %p175 = por %p173, %p174
      %p176 = scmp.ne.s32.totalorder %s167, %s168
      %p177 = scmp.eq.s32.totalorder %s26, 0
      %p178 = por %p176, %p177
      %p179 = scmp.ne.s32.totalorder %s167, %s168
      %p180 = scmp.eq.s32.totalorder %s27, 1
      %p181 = por %p179, %p180
      %p183 = scmp.ne.s32.totalorder %s168, %s182
      %p184 = scmp.eq.s32.totalorder %s27, 0
      %p185 = por %p183, %p184
      %s186 = ssub.s32 %s21, %s28
      %p187 = scmp.eq.s32.totalorder %s186, 0
      %s189 = sadd.s32 %s188, 1
      %s190 = scalar_select %p187, %s188, %s189
      %p193 = pneg %p187
      %p194 = scmp.eq.s32.totalorder %s21, 1
      %p195 = por %p193, %p194
      %p196 = scmp.ne.s32.totalorder %s188, %s191
      %p197 = scmp.eq.s32.totalorder %s21, 0
      %p198 = por %p196, %p197
      %p199 = scmp.ne.s32.totalorder %s188, %s191
      %p200 = scmp.eq.s32.totalorder %s26, 1
      %p201 = por %p199, %p200
      %p202 = scmp.ne.s32.totalorder %s191, %s192
      %p203 = scmp.eq.s32.totalorder %s26, 0
      %p204 = por %p202, %p203
      %p205 = scmp.ne.s32.totalorder %s191, %s192
      %p206 = scmp.eq.s32.totalorder %s27, 1
      %p207 = por %p205, %p206
      %p209 = scmp.ne.s32.totalorder %s192, %s208
      %p210 = scmp.eq.s32.totalorder %s27, 0
      %p211 = por %p209, %p210
      %s212 = ssub.s32 %s21, %s28
      %p213 = scmp.eq.s32.totalorder %s212, 0
      %s215 = sadd.s32 %s214, 1
      %s216 = scalar_select %p213, %s214, %s215
      %p219 = pneg %p213
      %p220 = scmp.eq.s32.totalorder %s21, 1
      %p221 = por %p219, %p220
      %p222 = scmp.ne.s32.totalorder %s214, %s217
      %p223 = scmp.eq.s32.totalorder %s21, 0
      %p224 = por %p222, %p223
      %p225 = scmp.ne.s32.totalorder %s214, %s217
      %p226 = scmp.eq.s32.totalorder %s26, 1
      %p227 = por %p225, %p226
      %p228 = scmp.ne.s32.totalorder %s217, %s218
      %p229 = scmp.eq.s32.totalorder %s26, 0
      %p230 = por %p228, %p229
      %p231 = scmp.ne.s32.totalorder %s217, %s218
      %p232 = scmp.eq.s32.totalorder %s27, 1
      %p233 = por %p231, %p232
      %p235 = scmp.ne.s32.totalorder %s218, %s234
      %p236 = scmp.eq.s32.totalorder %s27, 0
      %p237 = por %p235, %p236
      %p238 = scmp.le.s32.totalorder 1, %s21
      %p239 = scmp.lt.s32.totalorder %s21, 3
      %p240 = pnand %p238, %p239
      %p241 = pneg %p240
      // Predicated region
      $region9: #{final_attention_qkv_add.1} parent=5 // pred_check
        _
      $region10: #{final_attention_qkv_add.1} parent=5 // pred_check_branch
        %243 = sbr.rel (%p240) target = $region12
      $region11: #{final_attention_qkv_add.1} parent=5 // pred_region
        %s244 = ssub.s32 %s21, 1
        // Predicated region
        $region13: #{final_attention_qkv_add.1} parent=11 // pred_check
          %p245 = pneg %p94
        $region14: #{final_attention_qkv_add.1} parent=11 // pred_check_branch
          %247 = sbr.rel (%p245) target = $region16
        $region15: #{final_attention_qkv_add.1} parent=11 // pred_region
          _
        $region16: #{final_attention_qkv_add.1} parent=11 // pred_fallthru
          _
        // Predicated region
        $region17: #{final_attention_qkv_add.1} parent=11 // pred_check
          %p248 = pneg %p115
        $region18: #{final_attention_qkv_add.1} parent=11 // pred_check_branch
          %250 = sbr.rel (%p248) target = $region20
        $region19: #{final_attention_qkv_add.1} parent=11 // pred_region
          _
        $region20: #{final_attention_qkv_add.1} parent=11 // pred_fallthru
          _
        // Predicated region
        $region21: #{final_attention_qkv_add.1} parent=11 // pred_check
          %p251 = pneg %p136
        $region22: #{final_attention_qkv_add.1} parent=11 // pred_check_branch
          %253 = sbr.rel (%p251) target = $region24
        $region23: #{final_attention_qkv_add.1} parent=11 // pred_region
          _
        $region24: #{final_attention_qkv_add.1} parent=11 // pred_fallthru
          _
        // Predicated region
        $region25: #{final_attention_qkv_add.1} parent=11 // pred_check
          %p254 = pneg %p157
        $region26: #{final_attention_qkv_add.1} parent=11 // pred_check_branch
          %256 = sbr.rel (%p254) target = $region28
        $region27: #{final_attention_qkv_add.1} parent=11 // pred_region
          _
        $region28: #{final_attention_qkv_add.1} parent=11 // pred_fallthru
          _
        // Predicated region
        $region29: #{final_attention_qkv_add.1} parent=11 // pred_check
          %p257 = pneg %p178
        $region30: #{final_attention_qkv_add.1} parent=11 // pred_check_branch
          %259 = sbr.rel (%p257) target = $region32
        $region31: #{final_attention_qkv_add.1} parent=11 // pred_region
          _
        $region32: #{final_attention_qkv_add.1} parent=11 // pred_fallthru
          _
      $region12: #{final_attention_qkv_add.1} parent=5 // pred_fallthru
        _
      %p260 = scmp.lt.s32.totalorder %s21, 2
      // Predicated region
      $region33: #{final_attention_qkv_add.1} parent=5 // pred_check
        %p261 = pneg %p260
      $region34: #{final_attention_qkv_add.1} parent=5 // pred_check_branch
        %263 = sbr.rel (%p261) target = $region36
      $region35: #{final_attention_qkv_add.1} parent=5 // pred_region
        // Predicated region
        $region37: #{final_attention_qkv_add.1} parent=35 // pred_check
          %p264 = pneg %p41
        $region38: #{final_attention_qkv_add.1} parent=35 // pred_check_branch
          %266 = sbr.rel (%p264) target = $region40
        $region39: #{final_attention_qkv_add.1} parent=35 // pred_region
          %s267 = smul.u32 8, %s21
          %p268 = scmp.lt.s32.totalorder %s267, 15
          %s269 = scalar_select %p268, %s267, 15
          %s270 = smul.addr %s269, 2
          %s271 = smul.addr %s270, 8
          %s272 = scalar_lea.vmem %s0, %s271
          %s273 = smul.u32 8, %s21
        $region40: #{final_attention_qkv_add.1} parent=35 // pred_fallthru
          _
        // Predicated region
        $region41: #{final_attention_qkv_add.1} parent=35 // pred_check
          %p274 = pneg %p67
        $region42: #{final_attention_qkv_add.1} parent=35 // pred_check_branch
          %276 = sbr.rel (%p274) target = $region44
        $region43: #{final_attention_qkv_add.1} parent=35 // pred_region
          %p277 = scmp.lt.s32.totalorder %s21, 1
          %s278 = scalar_select %p277, %s21, 1
          %s279 = smul.addr %s278, 8
          %s280 = scalar_lea.vmem %s1, %s279
        $region44: #{final_attention_qkv_add.1} parent=35 // pred_fallthru
          _
      $region36: #{final_attention_qkv_add.1} parent=5 // pred_fallthru
        _
      %p281 = scmp.le.s32.totalorder 1, %s21
      %p282 = scmp.lt.s32.totalorder %s21, 3
      %p283 = pnand %p281, %p282
      %p284 = pneg %p283
      // Predicated region
      $region45: #{final_attention_qkv_add.1} parent=5 // pred_check
        _
      $region46: #{final_attention_qkv_add.1} parent=5 // pred_check_branch
        %286 = sbr.rel (%p283) target = $region48
      $region47: #{final_attention_qkv_add.1} parent=5 // pred_region
        %s287 = ssub.s32 %s21, 1
        %s288 = smul.u32 8, %s26
        %p289 = scmp.lt.s32.totalorder %s288, 15
        %s290 = scalar_select %p289, %s288, 15
        %s291 = smul.addr %s290, 2
        %s292 = smul.addr %s291, 8
        %s293 = scalar_lea.vmem %s0, %s292
        %p294 = pneg %p47
        %p295 = pneg %p44
        %p296 = scmp.lt.s32.totalorder %s26, 1
        %s297 = scalar_select %p296, %s26, 1
        %s298 = smul.addr %s297, 8
        %s299 = scalar_lea.vmem %s1, %s298
        %p300 = pneg %p73
        %p301 = pneg %p70
        %p302 = pneg %p94
        %p303 = pneg %p91
        %p304 = pneg %p115
        %p305 = pneg %p112
        %p306 = pneg %p136
        %p307 = pneg %p133
        %p308 = pneg %p157
        %p309 = pneg %p154
        %p310 = pneg %p178
        %p311 = pneg %p175
        %p312 = pneg %p204
        %p313 = pneg %p201
        %s314 = sand.u32 %s191, 1
        %s315 = scalar_lea.sflag [#allocation3], %s314
        %s316 = sand.u32 %s191, 1
        %s317 = smul.addr %s316, 8
        %s318 = scalar_lea.vmem [#allocation2], %s317
        %p319 = pneg %p230
        %p320 = pneg %p227
        %s321 = sand.u32 %s217, 1
        %s322 = scalar_lea.sflag [#allocation5], %s321
        %s323 = sand.u32 %s217, 1
        %s324 = smul.addr %s323, 8
        %s325 = scalar_lea.vmem [#allocation4], %s324
        %s326 = smul.u32 8, %s26
        %p327 = scmp.lt.s32.totalorder %s326, 15
        %s328 = scalar_select %p327, %s326, 15
        %s329 = smul.addr %s328, 2
        %s330 = smul.addr %s329, 8
        %s331 = scalar_lea.vmem %s0, %s330
        %s332 = smul.u32 8, %s26
        %p333 = scmp.lt.s32.totalorder %s26, 1
        %s334 = scalar_select %p333, %s26, 1
        %s335 = smul.addr %s334, 8
        %s336 = scalar_lea.vmem %s1, %s335
        %v337 = vld [vmem:[%s331] sm:$0xff]
        %v338 = vld [vmem:[%s331 + $0x8] sm:$0xff]
        %v339 = vld [vmem:[%s331 + $0x10] sm:$0xff]
        %v340 = vld [vmem:[%s331 + $0x18] sm:$0xff]
        %v341 = vld [vmem:[%s331 + $0x20] sm:$0xff]
        %v342 = vld [vmem:[%s331 + $0x28] sm:$0xff]
        %v343 = vld [vmem:[%s331 + $0x30] sm:$0xff]
        %v344 = vld [vmem:[%s331 + $0x38] sm:$0xff]
        %v345 = vld [vmem:[%s331 + $0x40] sm:$0xff]
        %v346 = vld [vmem:[%s331 + $0x48] sm:$0xff]
        %v347 = vld [vmem:[%s331 + $0x50] sm:$0xff]
        %v348 = vld [vmem:[%s331 + $0x58] sm:$0xff]
        %v349 = vld [vmem:[%s331 + $0x60] sm:$0xff]
        %v350 = vld [vmem:[%s331 + $0x68] sm:$0xff]
        %v351 = vld [vmem:[%s331 + $0x70] sm:$0xff]
        %v352 = vld [vmem:[%s331 + $0x78] sm:$0xff]
        %v353 = vld [vmem:[%s4] sm:$0xff]
        %v354 = vld [vmem:[%s4 + $0x8] sm:$0xff]
        %v355 = vld [vmem:[%s4 + $0x10] sm:$0xff]
        %v356 = vld [vmem:[%s4 + $0x18] sm:$0xff]
        %v357 = vld [vmem:[%s4 + $0x20] sm:$0xff]
        %v358 = vld [vmem:[%s4 + $0x28] sm:$0xff]
        %v359 = vld [vmem:[%s4 + $0x30] sm:$0xff]
        %v360 = vld [vmem:[%s4 + $0x38] sm:$0xff]
        %v361 = vld [vmem:[%s4 + $0x40] sm:$0xff]
        %v362 = vld [vmem:[%s4 + $0x48] sm:$0xff]
        %v363 = vld [vmem:[%s4 + $0x50] sm:$0xff]
        %v364 = vld [vmem:[%s4 + $0x58] sm:$0xff]
        %v365 = vld [vmem:[%s4 + $0x60] sm:$0xff]
        %v366 = vld [vmem:[%s4 + $0x68] sm:$0xff]
        %v367 = vld [vmem:[%s4 + $0x70] sm:$0xff]
        %v368 = vld [vmem:[%s4 + $0x78] sm:$0xff]
        %v369 = vld [vmem:[%s4 + $0x80] sm:$0xff]
        %v370 = vld [vmem:[%s4 + $0x88] sm:$0xff]
        %v371 = vld [vmem:[%s4 + $0x90] sm:$0xff]
        %v372 = vld [vmem:[%s4 + $0x98] sm:$0xff]
        %v373 = vld [vmem:[%s4 + $0xa0] sm:$0xff]
        %v374 = vld [vmem:[%s4 + $0xa8] sm:$0xff]
        %v375 = vld [vmem:[%s4 + $0xb0] sm:$0xff]
        %v376 = vld [vmem:[%s4 + $0xb8] sm:$0xff]
        %v377 = vld [vmem:[%s4 + $0xc0] sm:$0xff]
        %v378 = vld [vmem:[%s4 + $0xc8] sm:$0xff]
        %v379 = vld [vmem:[%s4 + $0xd0] sm:$0xff]
        %v380 = vld [vmem:[%s4 + $0xd8] sm:$0xff]
        %v381 = vld [vmem:[%s4 + $0xe0] sm:$0xff]
        %v382 = vld [vmem:[%s4 + $0xe8] sm:$0xff]
        %v383 = vld [vmem:[%s4 + $0xf0] sm:$0xff]
        %v384 = vld [vmem:[%s4 + $0xf8] sm:$0xff]
        %v385 = vld [vmem:[%s5] sm:$0x3]
        %v387 = vlaneseq
        %v388 = vshrl.u32 %v387, 7
        %v389 = vsub.s32 0, %v388
        %v390 = vrot.slane %v385, %v389
        %v391 = vlaneseq
        %v392 = vshrl.u32 %v391, 7
        %v393 = vsub.s32 1, %v392
        %v394 = vrot.slane %v385, %v393
        %397 = vmatprep.subr.mxu0 %v354
        %398 = vmatpush1.msra.mxu0 %v353
        %399 = vmatprep.subr.mxu0 %v356
        %400 = vmatpush1.msra.mxu0 %v355
        %401 = vmatprep.subr.mxu0 %v358
        %402 = vmatpush1.msra.mxu0 %v357
        %403 = vmatprep.subr.mxu0 %v360
        %404 = vmatpush1.msra.mxu0 %v359
        %405 = vmatprep.subr.mxu0 %v362
        %406 = vmatpush1.msra.mxu0 %v361
        %407 = vmatprep.subr.mxu0 %v364
        %408 = vmatpush1.msra.mxu0 %v363
        %409 = vmatprep.subr.mxu0 %v366
        %410 = vmatpush1.msra.mxu0 %v365
        %411 = vmatprep.subr.mxu0 %v368
        %412 = vmatpush1.msra.mxu0 %v367
        %413 = vmatprep.subr.mxu0 %v370
        %414 = vmatpush1.msra.mxu0 %v369
        %415 = vmatprep.subr.mxu0 %v372
        %416 = vmatpush1.msra.mxu0 %v371
        %417 = vmatprep.subr.mxu0 %v374
        %418 = vmatpush1.msra.mxu0 %v373
        %419 = vmatprep.subr.mxu0 %v376
        %420 = vmatpush1.msra.mxu0 %v375
        %421 = vmatprep.subr.mxu0 %v378
        %422 = vmatpush1.msra.mxu0 %v377
        %423 = vmatprep.subr.mxu0 %v380
        %424 = vmatpush1.msra.mxu0 %v379
        %425 = vmatprep.subr.mxu0 %v382
        %426 = vmatpush1.msra.mxu0 %v381
        %427 = vmatprep.subr.mxu0 %v384
        %428 = vmatpush1.msra.mxu0 %v383
        %429 = vmatprep.subr.mxu0 0.0
        %430 = vmatpush1.msra.mxu0 0.0
        %431 = vmatprep.subr.mxu0 0.0
        %432 = vmatpush1.msra.mxu0 0.0
        %433 = vmatprep.subr.mxu0 0.0
        %434 = vmatpush1.msra.mxu0 0.0
        %435 = vmatprep.subr.mxu0 0.0
        %436 = vmatpush1.msra.mxu0 0.0
        %437 = vmatprep.subr.mxu0 0.0
        %438 = vmatpush1.msra.mxu0 0.0
        %439 = vmatprep.subr.mxu0 0.0
        %440 = vmatpush1.msra.mxu0 0.0
        %441 = vmatprep.subr.mxu0 0.0
        %442 = vmatpush1.msra.mxu0 0.0
        %443 = vmatprep.subr.mxu0 0.0
        %444 = vmatpush1.msra.mxu0 0.0
        %445 = vmatprep.subr.mxu0 0.0
        %446 = vmatpush1.msra.mxu0 0.0
        %447 = vmatprep.subr.mxu0 0.0
        %448 = vmatpush1.msra.mxu0 0.0
        %449 = vmatprep.subr.mxu0 0.0
        %450 = vmatpush1.msra.mxu0 0.0
        %451 = vmatprep.subr.mxu0 0.0
        %452 = vmatpush1.msra.mxu0 0.0
        %453 = vmatprep.subr.mxu0 0.0
        %454 = vmatpush1.msra.mxu0 0.0
        %455 = vmatprep.subr.mxu0 0.0
        %456 = vmatpush1.msra.mxu0 0.0
        %457 = vmatprep.subr.mxu0 0.0
        %458 = vmatpush1.msra.mxu0 0.0
        %459 = vmatprep.subr.mxu0 0.0
        %460 = vmatpush1.msra.mxu0 0.0
        %461 = vmatprep.mubr.f32.mxu0 0.0
        %462 = vmatmul.mubr.f32.gmra.mrb[0].mxu0 %v337
        %v463 = vpop.f32.mrb[0].mxu0
        %v464 = vadd.f32 %v390, %v463
        %v465 = vpop.f32.mrb[0].mxu0
        %v466 = vadd.f32 %v394, %v465
        %467 = vmatprep.mubr.f32.mxu0 0.0
        %468 = vmatmul.mubr.f32.gmra.mrb[0].mxu0 %v338
        %v469 = vpop.f32.mrb[0].mxu0
        %v470 = vadd.f32 %v390, %v469
        %v471 = vpop.f32.mrb[0].mxu0
        %v472 = vadd.f32 %v394, %v471
        %473 = vmatprep.mubr.f32.mxu0 0.0
        %474 = vmatmul.mubr.f32.gmra.mrb[0].mxu0 %v339
        %v475 = vpop.f32.mrb[0].mxu0
        %v476 = vadd.f32 %v390, %v475
        %v477 = vpop.f32.mrb[0].mxu0
        %v478 = vadd.f32 %v394, %v477
        %479 = vmatprep.mubr.f32.mxu0 0.0
        %480 = vmatmul.mubr.f32.gmra.mrb[0].mxu0 %v340
        %v481 = vpop.f32.mrb[0].mxu0
        %v482 = vadd.f32 %v390, %v481
        %v483 = vpop.f32.mrb[0].mxu0
        %v484 = vadd.f32 %v394, %v483
        %485 = vmatprep.mubr.f32.mxu0 0.0
        %486 = vmatmul.mubr.f32.gmra.mrb[0].mxu0 %v341
        %v487 = vpop.f32.mrb[0].mxu0
        %v488 = vadd.f32 %v390, %v487
        %v489 = vpop.f32.mrb[0].mxu0
        %v490 = vadd.f32 %v394, %v489
        %491 = vmatprep.mubr.f32.mxu0 0.0
        %492 = vmatmul.mubr.f32.gmra.mrb[0].mxu0 %v342
        %v493 = vpop.f32.mrb[0].mxu0
        %v494 = vadd.f32 %v390, %v493
        %v495 = vpop.f32.mrb[0].mxu0
        %v496 = vadd.f32 %v394, %v495
        %497 = vmatprep.mubr.f32.mxu0 0.0
        %498 = vmatmul.mubr.f32.gmra.mrb[0].mxu0 %v343
        %v499 = vpop.f32.mrb[0].mxu0
        %v500 = vadd.f32 %v390, %v499
        %v501 = vpop.f32.mrb[0].mxu0
        %v502 = vadd.f32 %v394, %v501
        %503 = vmatprep.mubr.f32.mxu0 0.0
        %504 = vmatmul.mubr.f32.gmra.mrb[0].mxu0 %v344
        %v505 = vpop.f32.mrb[0].mxu0
        %v506 = vadd.f32 %v390, %v505
        %v507 = vpop.f32.mrb[0].mxu0
        %v508 = vadd.f32 %v394, %v507
        %509 = vmatprep.mubr.f32.mxu0 0.0
        %510 = vmatmul.mubr.f32.gmra.mrb[0].mxu0 %v345
        %v511 = vpop.f32.mrb[0].mxu0
        %v512 = vadd.f32 %v390, %v511
        %v513 = vpop.f32.mrb[0].mxu0
        %v514 = vadd.f32 %v394, %v513
        %515 = vmatprep.mubr.f32.mxu0 0.0
        %516 = vmatmul.mubr.f32.gmra.mrb[0].mxu0 %v346
        %v517 = vpop.f32.mrb[0].mxu0
        %v518 = vadd.f32 %v390, %v517
        %v519 = vpop.f32.mrb[0].mxu0
        %v520 = vadd.f32 %v394, %v519
        %521 = vmatprep.mubr.f32.mxu0 0.0
        %522 = vmatmul.mubr.f32.gmra.mrb[0].mxu0 %v347
        %v523 = vpop.f32.mrb[0].mxu0
        %v524 = vadd.f32 %v390, %v523
        %v525 = vpop.f32.mrb[0].mxu0
        %v526 = vadd.f32 %v394, %v525
        %527 = vmatprep.mubr.f32.mxu0 0.0
        %528 = vmatmul.mubr.f32.gmra.mrb[0].mxu0 %v348
        %v529 = vpop.f32.mrb[0].mxu0
        %v530 = vadd.f32 %v390, %v529
        %v531 = vpop.f32.mrb[0].mxu0
        %v532 = vadd.f32 %v394, %v531
        %533 = vmatprep.mubr.f32.mxu0 0.0
        %534 = vmatmul.mubr.f32.gmra.mrb[0].mxu0 %v349
        %v535 = vpop.f32.mrb[0].mxu0
        %v536 = vadd.f32 %v390, %v535
        %v537 = vpop.f32.mrb[0].mxu0
        %v538 = vadd.f32 %v394, %v537
        %539 = vmatprep.mubr.f32.mxu0 0.0
        %540 = vmatmul.mubr.f32.gmra.mrb[0].mxu0 %v350
        %v541 = vpop.f32.mrb[0].mxu0
        %v542 = vadd.f32 %v390, %v541
        %v543 = vpop.f32.mrb[0].mxu0
        %v544 = vadd.f32 %v394, %v543
        %545 = vmatprep.mubr.f32.mxu0 0.0
        %546 = vmatmul.mubr.f32.gmra.mrb[0].mxu0 %v351
        %v547 = vpop.f32.mrb[0].mxu0
        %v548 = vadd.f32 %v390, %v547
        %v549 = vpop.f32.mrb[0].mxu0
        %v550 = vadd.f32 %v394, %v549
        %551 = vmatprep.mubr.f32.mxu0 0.0
        %552 = vmatmul.mubr.f32.gmra.mrb[0].mxu0 %v352
        %v553 = vpop.f32.mrb[0].mxu0
        %v554 = vadd.f32 %v390, %v553
        %v555 = vpop.f32.mrb[0].mxu0
        %v556 = vadd.f32 %v394, %v555
        %557 = vdwg.mxu0
        %v558 = vld [vmem:[%s336] sm:$0xff]
        %v559 = vld [vmem:[%s2] sm:$0xff]
        %v560 = vld [vmem:[%s2 + $0x8] sm:$0xff]
        %v561 = vld [vmem:[%s2 + $0x10] sm:$0xff]
        %v562 = vld [vmem:[%s2 + $0x18] sm:$0xff]
        %v563 = vld [vmem:[%s2 + $0x20] sm:$0xff]
        %v564 = vld [vmem:[%s2 + $0x28] sm:$0xff]
        %v565 = vld [vmem:[%s2 + $0x30] sm:$0xff]
        %v566 = vld [vmem:[%s2 + $0x38] sm:$0xff]
        %v567 = vld [vmem:[%s2 + $0x40] sm:$0xff]
        %v568 = vld [vmem:[%s2 + $0x48] sm:$0xff]
        %v569 = vld [vmem:[%s2 + $0x50] sm:$0xff]
        %v570 = vld [vmem:[%s2 + $0x58] sm:$0xff]
        %v571 = vld [vmem:[%s2 + $0x60] sm:$0xff]
        %v572 = vld [vmem:[%s2 + $0x68] sm:$0xff]
        %v573 = vld [vmem:[%s2 + $0x70] sm:$0xff]
        %v574 = vld [vmem:[%s2 + $0x78] sm:$0xff]
        %v575 = vld [vmem:[%s3] sm:$0x1]
        %v577 = vlaneseq
        %v578 = vshrl.u32 %v577, 7
        %v579 = vsub.s32 0, %v578
        %v580 = vrot.slane %v575, %v579
        %582 = vmatprep.subr.mxu0 0.0
        %583 = vmatpush1.msra.mxu0 %v559
        %584 = vmatprep.subr.mxu0 0.0
        %585 = vmatpush1.msra.mxu0 %v560
        %586 = vmatprep.subr.mxu0 0.0
        %587 = vmatpush1.msra.mxu0 %v561
        %588 = vmatprep.subr.mxu0 0.0
        %589 = vmatpush1.msra.mxu0 %v562
        %590 = vmatprep.subr.mxu0 0.0
        %591 = vmatpush1.msra.mxu0 %v563
        %592 = vmatprep.subr.mxu0 0.0
        %593 = vmatpush1.msra.mxu0 %v564
        %594 = vmatprep.subr.mxu0 0.0
        %595 = vmatpush1.msra.mxu0 %v565
        %596 = vmatprep.subr.mxu0 0.0
        %597 = vmatpush1.msra.mxu0 %v566
        %598 = vmatprep.subr.mxu0 0.0
        %599 = vmatpush1.msra.mxu0 %v567
        %600 = vmatprep.subr.mxu0 0.0
        %601 = vmatpush1.msra.mxu0 %v568
        %602 = vmatprep.subr.mxu0 0.0
        %603 = vmatpush1.msra.mxu0 %v569
        %604 = vmatprep.subr.mxu0 0.0
        %605 = vmatpush1.msra.mxu0 %v570
        %606 = vmatprep.subr.mxu0 0.0
        %607 = vmatpush1.msra.mxu0 %v571
        %608 = vmatprep.subr.mxu0 0.0
        %609 = vmatpush1.msra.mxu0 %v572
        %610 = vmatprep.subr.mxu0 0.0
        %611 = vmatpush1.msra.mxu0 %v573
        %612 = vmatprep.subr.mxu0 0.0
        %613 = vmatpush1.msra.mxu0 %v574
        %614 = vmatprep.subr.mxu0 0.0
        %615 = vmatpush1.msra.mxu0 0.0
        %616 = vmatprep.subr.mxu0 0.0
        %617 = vmatpush1.msra.mxu0 0.0
        %618 = vmatprep.subr.mxu0 0.0
        %619 = vmatpush1.msra.mxu0 0.0
        %620 = vmatprep.subr.mxu0 0.0
        %621 = vmatpush1.msra.mxu0 0.0
        %622 = vmatprep.subr.mxu0 0.0
        %623 = vmatpush1.msra.mxu0 0.0
        %624 = vmatprep.subr.mxu0 0.0
        %625 = vmatpush1.msra.mxu0 0.0
        %626 = vmatprep.subr.mxu0 0.0
        %627 = vmatpush1.msra.mxu0 0.0
        %628 = vmatprep.subr.mxu0 0.0
        %629 = vmatpush1.msra.mxu0 0.0
        %630 = vmatprep.subr.mxu0 0.0
        %631 = vmatpush1.msra.mxu0 0.0
        %632 = vmatprep.subr.mxu0 0.0
        %633 = vmatpush1.msra.mxu0 0.0
        %634 = vmatprep.subr.mxu0 0.0
        %635 = vmatpush1.msra.mxu0 0.0
        %636 = vmatprep.subr.mxu0 0.0
        %637 = vmatpush1.msra.mxu0 0.0
        %638 = vmatprep.subr.mxu0 0.0
        %639 = vmatpush1.msra.mxu0 0.0
        %640 = vmatprep.subr.mxu0 0.0
        %641 = vmatpush1.msra.mxu0 0.0
        %642 = vmatprep.subr.mxu0 0.0
        %643 = vmatpush1.msra.mxu0 0.0
        %644 = vmatprep.subr.mxu0 0.0
        %645 = vmatpush1.msra.mxu0 0.0
        %646 = vmatprep.mubr.f32.mxu0 0.0
        %647 = vmatmul.mubr.f32.gmra.mrb[0].mxu0 %v558
        %v648 = vpop.f32.mrb[0].mxu0
        %v649 = vadd.f32 %v580, %v648
        %v650 = vpop.f32.mrb[0].mxu0
        %651 = vdwg.mxu0
        %v653 = vcombine.high %v649, %v649
        %v655 = vunpack.c.l.s4 1966171168
        %v656 = vunpack.c.0.s8 %v655
        %v657 = vlaneseq
        %v658 = vshrl.u32 %v657, 7
        %v659 = vsub.s32 %v656, %v658
        %v660 = vrot.slane %v649, %v659
        %v662 = vunpack.c.l.s4 1966171168
        %v663 = vunpack.c.0.s8 %v662
        %v664 = vlaneseq
        %v665 = vshrl.u32 %v664, 7
        %v666 = vsub.s32 %v663, %v665
        %v667 = vrot.slane %v653, %v666
        %v668 = vcombine.high %v660, %v660
        %v669 = vcombine.high %v667, %v667
        %v671 = vunpack.c.l.s4 1966171168
        %v672 = vunpack.c.0.s8 %v671
        %v673 = vlaneseq
        %v674 = vshrl.u32 %v673, 7
        %v675 = vsub.s32 %v672, %v674
        %v676 = vrot.slane %v660, %v675
        %v678 = vunpack.c.l.s4 1966171168
        %v679 = vunpack.c.0.s8 %v678
        %v680 = vlaneseq
        %v681 = vshrl.u32 %v680, 7
        %v682 = vsub.s32 %v679, %v681
        %v683 = vrot.slane %v667, %v682
        %v685 = vunpack.c.l.s4 1966171168
        %v686 = vunpack.c.0.s8 %v685
        %v687 = vlaneseq
        %v688 = vshrl.u32 %v687, 7
        %v689 = vsub.s32 %v686, %v688
        %v690 = vrot.slane %v668, %v689
        %v692 = vunpack.c.l.s4 1966171168
        %v693 = vunpack.c.0.s8 %v692
        %v694 = vlaneseq
        %v695 = vshrl.u32 %v694, 7
        %v696 = vsub.s32 %v693, %v695
        %v697 = vrot.slane %v669, %v696
        %v698 = vcombine.high %v676, %v676
        %v699 = vcombine.high %v683, %v683
        %v700 = vcombine.high %v690, %v690
        %v701 = vcombine.high %v697, %v697
        %v702 = vlaneseq
        %v703 = vshrl.u32 %v702, 7
        %v704 = vsub.s32 0, %v703
        %v705 = vrot.slane %v676, %v704
        %v706 = vlaneseq
        %v707 = vshrl.u32 %v706, 7
        %v708 = vsub.s32 0, %v707
        %v709 = vrot.slane %v690, %v708
        %v710 = vlaneseq
        %v711 = vshrl.u32 %v710, 7
        %v712 = vsub.s32 0, %v711
        %v713 = vrot.slane %v698, %v712
        %v714 = vlaneseq
        %v715 = vshrl.u32 %v714, 7
        %v716 = vsub.s32 0, %v715
        %v717 = vrot.slane %v700, %v716
        %v718 = vlaneseq
        %v719 = vshrl.u32 %v718, 7
        %v720 = vsub.s32 0, %v719
        %v721 = vrot.slane %v683, %v720
        %v722 = vlaneseq
        %v723 = vshrl.u32 %v722, 7
        %v724 = vsub.s32 0, %v723
        %v725 = vrot.slane %v697, %v724
        %v726 = vlaneseq
        %v727 = vshrl.u32 %v726, 7
        %v728 = vsub.s32 0, %v727
        %v729 = vrot.slane %v699, %v728
        %v730 = vlaneseq
        %v731 = vshrl.u32 %v730, 7
        %v732 = vsub.s32 0, %v731
        %v733 = vrot.slane %v701, %v732
        %v742 = vadd.f32 %v705, %v464
        %v743 = vadd.f32 %v705, %v470
        %v744 = vadd.f32 %v709, %v476
        %v745 = vadd.f32 %v709, %v482
        %v746 = vadd.f32 %v713, %v488
        %v747 = vadd.f32 %v713, %v494
        %v748 = vadd.f32 %v717, %v500
        %v749 = vadd.f32 %v717, %v506
        %v750 = vadd.f32 %v721, %v512
        %v751 = vadd.f32 %v721, %v518
        %v752 = vadd.f32 %v725, %v524
        %v753 = vadd.f32 %v725, %v530
        %v754 = vadd.f32 %v729, %v536
        %v755 = vadd.f32 %v729, %v542
        %v756 = vadd.f32 %v733, %v548
        %v757 = vadd.f32 %v733, %v554
        %v758 = vtanh.pop %v742
        %v759 = vtanh.pop %v743
        %v760 = vtanh.pop %v744
        %v761 = vtanh.pop %v745
        %v762 = vtanh.pop %v746
        %v763 = vtanh.pop %v747
        %v764 = vtanh.pop %v748
        %v765 = vtanh.pop %v749
        %v766 = vtanh.pop %v750
        %v767 = vtanh.pop %v751
        %v768 = vtanh.pop %v752
        %v769 = vtanh.pop %v753
        %v770 = vtanh.pop %v754
        %v771 = vtanh.pop %v755
        %v772 = vtanh.pop %v756
        %v773 = vtanh.pop %v757
        %v774 = vld [vmem:[%s6] sm:$0x1]
        %v776 = vlaneseq
        %v777 = vshrl.u32 %v776, 7
        %v778 = vsub.s32 0, %v777
        %v779 = vrot.slane %v774, %v778
        %v781 = vmul.f32 %v758, %v779
        %v782 = vmul.f32 %v759, %v779
        %v783 = vmul.f32 %v760, %v779
        %v784 = vmul.f32 %v761, %v779
        %v785 = vmul.f32 %v762, %v779
        %v786 = vmul.f32 %v763, %v779
        %v787 = vmul.f32 %v764, %v779
        %v788 = vmul.f32 %v765, %v779
        %v789 = vmul.f32 %v766, %v779
        %v790 = vmul.f32 %v767, %v779
        %v791 = vmul.f32 %v768, %v779
        %v792 = vmul.f32 %v769, %v779
        %v793 = vmul.f32 %v770, %v779
        %v794 = vmul.f32 %v771, %v779
        %v795 = vmul.f32 %v772, %v779
        %v796 = vmul.f32 %v773, %v779
        %797 = vadd.xlane.f32.xlu0 %v781
        %v798 = vpop.xlane.xlu0 %797
        %799 = vadd.xlane.f32.xlu0 %v782
        %v800 = vpop.xlane.xlu0 %799
        %801 = vadd.xlane.f32.xlu0 %v783
        %v802 = vpop.xlane.xlu0 %801
        %803 = vadd.xlane.f32.xlu0 %v784
        %v804 = vpop.xlane.xlu0 %803
        %805 = vadd.xlane.f32.xlu0 %v785
        %v806 = vpop.xlane.xlu0 %805
        %807 = vadd.xlane.f32.xlu0 %v786
        %v808 = vpop.xlane.xlu0 %807
        %809 = vadd.xlane.f32.xlu0 %v787
        %v810 = vpop.xlane.xlu0 %809
        %811 = vadd.xlane.f32.xlu0 %v788
        %v812 = vpop.xlane.xlu0 %811
        %813 = vadd.xlane.f32.xlu0 %v789
        %v814 = vpop.xlane.xlu0 %813
        %815 = vadd.xlane.f32.xlu0 %v790
        %v816 = vpop.xlane.xlu0 %815
        %817 = vadd.xlane.f32.xlu0 %v791
        %v818 = vpop.xlane.xlu0 %817
        %819 = vadd.xlane.f32.xlu0 %v792
        %v820 = vpop.xlane.xlu0 %819
        %821 = vadd.xlane.f32.xlu0 %v793
        %v822 = vpop.xlane.xlu0 %821
        %823 = vadd.xlane.f32.xlu0 %v794
        %v824 = vpop.xlane.xlu0 %823
        %825 = vadd.xlane.f32.xlu0 %v795
        %v826 = vpop.xlane.xlu0 %825
        %827 = vadd.xlane.f32.xlu0 %v796
        %v828 = vpop.xlane.xlu0 %827
        %v829 = vlaneseq
        %v830 = vand.u32 %v829, 127
        %vm831 = vcmp.lt.s32.totalorder %v830, 10
        %v848 = vlaneseq
        %v849 = vshrl.u32 %v848, 7
        %v850 = vsub.s32 %v830, %v849
        %v851 = vrot.slane %v798, %v850
        %v852 = vadd.s32 %v830, 4294967288
        %v853 = vlaneseq
        %v854 = vshrl.u32 %v853, 7
        %v855 = vsub.s32 %v852, %v854
        %v856 = vrot.slane %v800, %v855
        %vm857 = vcmask 130112
        %v858 = vsel %vm857, %v856, %v851
        %v859 = vlaneseq
        %v860 = vshrl.u32 %v859, 7
        %v861 = vsub.s32 %v830, %v860
        %v862 = vrot.slane %v802, %v861
        %v863 = vlaneseq
        %v864 = vshrl.u32 %v863, 7
        %v865 = vsub.s32 %v852, %v864
        %v866 = vrot.slane %v804, %v865
        %v867 = vsel %vm857, %v866, %v862
        %v868 = vlaneseq
        %v869 = vshrl.u32 %v868, 7
        %v870 = vsub.s32 %v830, %v869
        %v871 = vrot.slane %v806, %v870
        %v872 = vlaneseq
        %v873 = vshrl.u32 %v872, 7
        %v874 = vsub.s32 %v852, %v873
        %v875 = vrot.slane %v808, %v874
        %v876 = vsel %vm857, %v875, %v871
        %v877 = vlaneseq
        %v878 = vshrl.u32 %v877, 7
        %v879 = vsub.s32 %v830, %v878
        %v880 = vrot.slane %v810, %v879
        %v881 = vlaneseq
        %v882 = vshrl.u32 %v881, 7
        %v883 = vsub.s32 %v852, %v882
        %v884 = vrot.slane %v812, %v883
        %v885 = vsel %vm857, %v884, %v880
        %v886 = vlaneseq
        %v887 = vshrl.u32 %v886, 7
        %v888 = vsub.s32 %v830, %v887
        %v889 = vrot.slane %v814, %v888
        %v890 = vlaneseq
        %v891 = vshrl.u32 %v890, 7
        %v892 = vsub.s32 %v852, %v891
        %v893 = vrot.slane %v816, %v892
        %v894 = vsel %vm857, %v893, %v889
        %v895 = vlaneseq
        %v896 = vshrl.u32 %v895, 7
        %v897 = vsub.s32 %v830, %v896
        %v898 = vrot.slane %v818, %v897
        %v899 = vlaneseq
        %v900 = vshrl.u32 %v899, 7
        %v901 = vsub.s32 %v852, %v900
        %v902 = vrot.slane %v820, %v901
        %v903 = vsel %vm857, %v902, %v898
        %v904 = vlaneseq
        %v905 = vshrl.u32 %v904, 7
        %v906 = vsub.s32 %v830, %v905
        %v907 = vrot.slane %v822, %v906
        %v908 = vlaneseq
        %v909 = vshrl.u32 %v908, 7
        %v910 = vsub.s32 %v852, %v909
        %v911 = vrot.slane %v824, %v910
        %v912 = vsel %vm857, %v911, %v907
        %v913 = vlaneseq
        %v914 = vshrl.u32 %v913, 7
        %v915 = vsub.s32 %v830, %v914
        %v916 = vrot.slane %v826, %v915
        %v917 = vlaneseq
        %v918 = vshrl.u32 %v917, 7
        %v919 = vsub.s32 %v852, %v918
        %v920 = vrot.slane %v828, %v919
        %v921 = vsel %vm857, %v920, %v916
        %vm922 = vcmask 1041409
        %v923 = vsel %vm922, %v867, %v858
        %vm924 = vcmask 1042434
        %v925 = vsel %vm924, %v876, %v923
        %vm926 = vcmask 1043459
        %v927 = vsel %vm926, %v885, %v925
        %vm928 = vcmask 1044484
        %v929 = vsel %vm928, %v894, %v927
        %vm930 = vcmask 1045509
        %v931 = vsel %vm930, %v903, %v929
        %vm932 = vcmask 1046534
        %v933 = vsel %vm932, %v912, %v931
        %vm934 = vcmask 1047559
        %v935 = vsel %vm934, %v921, %v933
        %v937 = vsel %vm831, %v935, -1e+30
        %vm938 = vcmask 130048
        %v939 = vsel %vm938, %v937, -inf
        %940 = vmax.xlane.f32.xlu0 %v939
        %v941 = vpop.xlane.xlu0 %940
        %v942 = vsub.f32 %v937, %v941
        %v943 = vmul.f32 %v942, 1.442695
        %v944 = vpow.pop %v943
        %v945 = vsel %vm938, %v944, 0.0
        %946 = vadd.xlane.f32.xlu0 %v945
        %v947 = vpop.xlane.xlu0 %946
        %v948 = vrcp.pop %v947
        %v949 = vmul.f32 %v944, %v948
        %v950 = vlaneseq
        %v951 = vshrl.u32 %v950, 7
        %v952 = vsub.s32 0, %v951
        %v953 = vrot.slane %v949, %v952
        %955 = vbcast.lane.b32.xlu0 %v953, 256
        %v956 = vpop.permute.xlu0 %955
        %s958 = sor.u32 256, 8
        %959 = vbcast.lane.b32.xlu0 %v953, %s958
        %v960 = vpop.permute.xlu0 %959
        %v961 = vlaneseq
        %v962 = vshrl.u32 %v961, 7
        %v963 = vsub.s32 1, %v962
        %v964 = vrot.slane %v949, %v963
        %966 = vbcast.lane.b32.xlu0 %v964, 256
        %v967 = vpop.permute.xlu0 %966
        %s969 = sor.u32 256, 8
        %970 = vbcast.lane.b32.xlu0 %v964, %s969
        %v971 = vpop.permute.xlu0 %970
        %v972 = vlaneseq
        %v973 = vshrl.u32 %v972, 7
        %v974 = vsub.s32 2, %v973
        %v975 = vrot.slane %v949, %v974
        %977 = vbcast.lane.b32.xlu0 %v975, 256
        %v978 = vpop.permute.xlu0 %977
        %s980 = sor.u32 256, 8
        %981 = vbcast.lane.b32.xlu0 %v975, %s980
        %v982 = vpop.permute.xlu0 %981
        %v983 = vlaneseq
        %v984 = vshrl.u32 %v983, 7
        %v985 = vsub.s32 3, %v984
        %v986 = vrot.slane %v949, %v985
        %988 = vbcast.lane.b32.xlu0 %v986, 256
        %v989 = vpop.permute.xlu0 %988
        %s991 = sor.u32 256, 8
        %992 = vbcast.lane.b32.xlu0 %v986, %s991
        %v993 = vpop.permute.xlu0 %992
        %v994 = vlaneseq
        %v995 = vshrl.u32 %v994, 7
        %v996 = vsub.s32 4, %v995
        %v997 = vrot.slane %v949, %v996
        %999 = vbcast.lane.b32.xlu0 %v997, 256
        %v1000 = vpop.permute.xlu0 %999
        %s1002 = sor.u32 256, 8
        %1003 = vbcast.lane.b32.xlu0 %v997, %s1002
        %v1004 = vpop.permute.xlu0 %1003
        %v1005 = vlaneseq
        %v1006 = vshrl.u32 %v1005, 7
        %v1007 = vsub.s32 5, %v1006
        %v1008 = vrot.slane %v949, %v1007
        %1010 = vbcast.lane.b32.xlu0 %v1008, 256
        %v1011 = vpop.permute.xlu0 %1010
        %s1013 = sor.u32 256, 8
        %1014 = vbcast.lane.b32.xlu0 %v1008, %s1013
        %v1015 = vpop.permute.xlu0 %1014
        %v1016 = vlaneseq
        %v1017 = vshrl.u32 %v1016, 7
        %v1018 = vsub.s32 6, %v1017
        %v1019 = vrot.slane %v949, %v1018
        %1021 = vbcast.lane.b32.xlu0 %v1019, 256
        %v1022 = vpop.permute.xlu0 %1021
        %s1024 = sor.u32 256, 8
        %1025 = vbcast.lane.b32.xlu0 %v1019, %s1024
        %v1026 = vpop.permute.xlu0 %1025
        %v1027 = vlaneseq
        %v1028 = vshrl.u32 %v1027, 7
        %v1029 = vsub.s32 7, %v1028
        %v1030 = vrot.slane %v949, %v1029
        %1032 = vbcast.lane.b32.xlu0 %v1030, 256
        %v1033 = vpop.permute.xlu0 %1032
        %s1035 = sor.u32 256, 8
        %1036 = vbcast.lane.b32.xlu0 %v1030, %s1035
        %v1037 = vpop.permute.xlu0 %1036
        %v1038 = vmul.f32 %v956, %v466
        %v1039 = vmul.f32 %v960, %v472
        %v1040 = vmul.f32 %v967, %v478
        %v1041 = vmul.f32 %v971, %v484
        %v1042 = vmul.f32 %v978, %v490
        %v1043 = vmul.f32 %v982, %v496
        %v1044 = vmul.f32 %v989, %v502
        %v1045 = vmul.f32 %v993, %v508
        %v1046 = vmul.f32 %v1000, %v514
        %v1047 = vmul.f32 %v1004, %v520
        %v1048 = vmul.f32 %v1011, %v526
        %v1049 = vmul.f32 %v1015, %v532
        %v1050 = vmul.f32 %v1022, %v538
        %v1051 = vmul.f32 %v1026, %v544
        %v1052 = vmul.f32 %v1033, %v550
        %v1053 = vmul.f32 %v1037, %v556
        %v1054 = vadd.f32 %v1038, %v1039
        %v1055 = vrot.slane %v1054, 4
        %v1056 = vadd.f32 %v1054, %v1055
        %v1057 = vrot.slane %v1056, 2
        %v1058 = vadd.f32 %v1056, %v1057
        %v1059 = vrot.slane %v1058, 1
        %v1060 = vadd.f32 %v1058, %v1059
        %v1061 = vadd.f32 %v1040, %v1041
        %v1062 = vrot.slane %v1061, 4
        %v1063 = vadd.f32 %v1061, %v1062
        %v1064 = vrot.slane %v1063, 2
        %v1065 = vadd.f32 %v1063, %v1064
        %v1066 = vrot.slane %v1065, 1
        %v1067 = vadd.f32 %v1065, %v1066
        %v1068 = vadd.f32 %v1042, %v1043
        %v1069 = vrot.slane %v1068, 4
        %v1070 = vadd.f32 %v1068, %v1069
        %v1071 = vrot.slane %v1070, 2
        %v1072 = vadd.f32 %v1070, %v1071
        %v1073 = vrot.slane %v1072, 1
        %v1074 = vadd.f32 %v1072, %v1073
        %v1075 = vadd.f32 %v1044, %v1045
        %v1076 = vrot.slane %v1075, 4
        %v1077 = vadd.f32 %v1075, %v1076
        %v1078 = vrot.slane %v1077, 2
        %v1079 = vadd.f32 %v1077, %v1078
        %v1080 = vrot.slane %v1079, 1
        %v1081 = vadd.f32 %v1079, %v1080
        %v1082 = vadd.f32 %v1046, %v1047
        %v1083 = vrot.slane %v1082, 4
        %v1084 = vadd.f32 %v1082, %v1083
        %v1085 = vrot.slane %v1084, 2
        %v1086 = vadd.f32 %v1084, %v1085
        %v1087 = vrot.slane %v1086, 1
        %v1088 = vadd.f32 %v1086, %v1087
        %v1089 = vadd.f32 %v1048, %v1049
        %v1090 = vrot.slane %v1089, 4
        %v1091 = vadd.f32 %v1089, %v1090
        %v1092 = vrot.slane %v1091, 2
        %v1093 = vadd.f32 %v1091, %v1092
        %v1094 = vrot.slane %v1093, 1
        %v1095 = vadd.f32 %v1093, %v1094
        %v1096 = vadd.f32 %v1050, %v1051
        %v1097 = vrot.slane %v1096, 4
        %v1098 = vadd.f32 %v1096, %v1097
        %v1099 = vrot.slane %v1098, 2
        %v1100 = vadd.f32 %v1098, %v1099
        %v1101 = vrot.slane %v1100, 1
        %v1102 = vadd.f32 %v1100, %v1101
        %v1103 = vadd.f32 %v1052, %v1053
        %v1104 = vrot.slane %v1103, 4
        %v1105 = vadd.f32 %v1103, %v1104
        %v1106 = vrot.slane %v1105, 2
        %v1107 = vadd.f32 %v1105, %v1106
        %v1108 = vrot.slane %v1107, 1
        %v1109 = vadd.f32 %v1107, %v1108
        %v1118 = vsel %vm922, %v1067, %v1060
        %v1119 = vsel %vm924, %v1074, %v1118
        %v1120 = vsel %vm926, %v1081, %v1119
        %v1121 = vsel %vm928, %v1088, %v1120
        %v1122 = vsel %vm930, %v1095, %v1121
        %v1123 = vsel %vm932, %v1102, %v1122
        %v1124 = vsel %vm934, %v1109, %v1123
        %1126 = vst [vmem:[%s318] sm:$0xff] %v1124
        %1127 = vst.msk [vmem:[%s325] sm:$0xff] %vm938, %v949
        %s1128 = sand.u32 %s191, 1
        %s1129 = scalar_lea.sflag [#allocation3], %s1128
        %s1130 = sand.u32 %s191, 1
        %s1131 = smul.addr %s1130, 8
        %s1132 = scalar_lea.vmem [#allocation2], %s1131
        %s1133 = sand.u32 %s217, 1
        %s1134 = scalar_lea.sflag [#allocation5], %s1133
        %s1135 = sand.u32 %s217, 1
        %s1136 = smul.addr %s1135, 8
        %s1137 = scalar_lea.vmem [#allocation4], %s1136
        // Predicated region
        $region49: #{final_attention_qkv_add.1} parent=47 // pred_check
          %p1138 = pneg %p201
        $region50: #{final_attention_qkv_add.1} parent=47 // pred_check_branch
          %1140 = sbr.rel (%p1138) target = $region52
        $region51: #{final_attention_qkv_add.1} parent=47 // pred_region
          %s1142 = ssub.s32 128, 128
          %1143 = vsyncadd %s1129, %s1142
          %s1144 = smul.addr %s26, 128
          %s1145 = scalar_lea.hbm %s7, %s1144
          %s1147 = sshll.u32 %s1132, 4
          %s1148 = int_to_ptr.vmem [resolvable:$true] %s1147
          %1150 = dma.vmem_to_hbm [thread:$0]  %s1148, 128, %s1145, %s1129
        $region52: #{final_attention_qkv_add.1} parent=47 // pred_fallthru
          _
        // Predicated region
        $region53: #{final_attention_qkv_add.1} parent=47 // pred_check
          %p1151 = pneg %p227
        $region54: #{final_attention_qkv_add.1} parent=47 // pred_check_branch
          %1153 = sbr.rel (%p1151) target = $region56
        $region55: #{final_attention_qkv_add.1} parent=47 // pred_region
          %s1155 = ssub.s32 128, 128
          %1156 = vsyncadd %s1134, %s1155
          %s1157 = smul.addr %s26, 128
          %s1158 = scalar_lea.hbm %s8, %s1157
          %s1160 = sshll.u32 %s1137, 4
          %s1161 = int_to_ptr.vmem [resolvable:$true] %s1160
          %1163 = dma.vmem_to_hbm [thread:$0]  %s1161, 128, %s1158, %s1134
        $region56: #{final_attention_qkv_add.1} parent=47 // pred_fallthru
          _
      $region48: #{final_attention_qkv_add.1} parent=5 // pred_fallthru
        _
      %p1164 = scmp.le.s32.totalorder 2, %s21
      // Predicated region
      $region57: #{final_attention_qkv_add.1} parent=5 // pred_check
        %p1165 = pneg %p1164
      $region58: #{final_attention_qkv_add.1} parent=5 // pred_check_branch
        %1167 = sbr.rel (%p1165) target = $region60
      $region59: #{final_attention_qkv_add.1} parent=5 // pred_region
        %s1168 = ssub.s32 %s21, 2
        // Predicated region
        $region61: #{final_attention_qkv_add.1} parent=59 // pred_check
          %p1169 = pneg %p207
        $region62: #{final_attention_qkv_add.1} parent=59 // pred_check_branch
          %1171 = sbr.rel (%p1169) target = $region64
        $region63: #{final_attention_qkv_add.1} parent=59 // pred_region
          %s1172 = sand.u32 %s192, 1
          %s1173 = scalar_lea.sflag [#allocation3], %s1172
          %s1174 = sand.u32 %s192, 1
          %s1175 = smul.addr %s1174, 8
          %s1176 = scalar_lea.vmem [#allocation2], %s1175
          %1177 = dma.done %s1173, 128
        $region64: #{final_attention_qkv_add.1} parent=59 // pred_fallthru
          _
        // Predicated region
        $region65: #{final_attention_qkv_add.1} parent=59 // pred_check
          %p1178 = pneg %p233
        $region66: #{final_attention_qkv_add.1} parent=59 // pred_check_branch
          %1180 = sbr.rel (%p1178) target = $region68
        $region67: #{final_attention_qkv_add.1} parent=59 // pred_region
          %s1181 = sand.u32 %s218, 1
          %s1182 = scalar_lea.sflag [#allocation5], %s1181
          %s1183 = sand.u32 %s218, 1
          %s1184 = smul.addr %s1183, 8
          %s1185 = scalar_lea.vmem [#allocation4], %s1184
          %1186 = dma.done %s1182, 128
        $region68: #{final_attention_qkv_add.1} parent=59 // pred_fallthru
          _
      $region60: #{final_attention_qkv_add.1} parent=5 // pred_fallthru
        _
    $region6: #{final_attention_qkv_add.1} parent=1 // loop_footer
      %s25 = sadd.s32 1, %s21
    $region7: #{final_attention_qkv_add.1} parent=1 // loop_footer_branch
      %20 = sbr.rel target = $region3
    $region8: #{final_attention_qkv_add.1} parent=1 // loop_exit
      _
    %1187 = vsyncpa [#allocation3], 1
    %s1188 = scalar_lea.sflag [#allocation3], 1
    %1189 = vsyncpa %s1188, 1
    %1190 = vsyncpa [#allocation5], 1
    %s1191 = scalar_lea.sflag [#allocation5], 1
    %1192 = vsyncpa %s1191, 1

</llo_original>
